<compile_context>
chip_gen: v7x
topology: tpu7x:2x2x1
jax: 0.10.0
libtpu: 0.0.40
codegen_flags: <defaults>
</compile_context>

<pallas_src>
import jax
import jax.numpy as jnp
from jax import lax
from jax.experimental import pallas as pl
from jax.experimental.pallas import tpu as pltpu

NEG_SLOPE = 0.1  # LeakyReLU negative_slope used by CBLR


def _leaky(x):
    return jnp.where(x > 0, x, NEG_SLOPE * x)


def basic_block_forward(x_nchw, params):
    """Pallas forward. x_nchw: (N, Cin, H, W) float32. params are raw layer tensors."""
    w1, s1, b1, w2, s2, b2 = params       # w1:(C0,Cin)  w2:(C1,C0,3,3) (OIHW)
    N, Cin, H, W = x_nchw.shape
    C0 = w1.shape[0]
    C1 = w2.shape[0]
    assert C1 == Cin, "residual add requires planes[1] == inplanes"
    HW = H * W

    # conv1 output channels padded to a sublane multiple (aligned tap concat)
    C0p = ((C0 + 7) // 8) * 8
    # lane-extension on each side of the flattened spatial axis (multiple of 128,
    # and >= W+1 which is the largest tap shift)
    PAD = ((W + 1 + 127) // 128) * 128

    # ---- fold BN scale into the conv weights (wrapper side) ----
    w1f = jnp.zeros((C0p, Cin), jnp.float32).at[:C0].set(w1 * s1[:, None])
    b1c = jnp.zeros((C0p, 1), jnp.float32).at[:C0, 0].set(b1)
    # (C1, 3, 3, C0p) -> (C1, 9*C0p); contraction index = (dh*3 + dw)*C0p + c
    w2s = jnp.transpose(w2, (0, 2, 3, 1)) * s2[:, None, None, None]
    w2f = jnp.zeros((C1, 3, 3, C0p), jnp.float32).at[..., :C0].set(w2s)
    w2f = w2f.reshape(C1, 9 * C0p)
    b2c = b2.reshape(C1, 1).astype(jnp.float32)

    x_flat = x_nchw.reshape(N, Cin, HW)   # free: NCHW already is (C, H*W)-major

    def kernel(x_ref, w1_ref, b1_ref, w2_ref, b2_ref, o_ref):
        x = x_ref[0]                                               # (Cin, HW)

        # --- CBLR #1: 1x1 conv (single MXU matmul) + folded-BN bias + LeakyReLU
        y = jnp.dot(w1_ref[...], x, preferred_element_type=jnp.float32)
        y = _leaky(y + b1_ref[...])                                # (C0p, HW)

        # --- build the 9 shifted taps of the 3x3 conv (zero padding = 1) ---
        # Zero-extend the flattened spatial axis once (lane-aligned pieces);
        # each tap is then a single static lane slice.
        zpad = jnp.zeros((C0p, PAD), jnp.float32)
        ye = jnp.concatenate([zpad, y, zpad], axis=1)              # (C0p, HW+2*PAD)

        w_idx = lax.broadcasted_iota(jnp.int32, (1, HW), 1) % W
        not_left = w_idx != 0            # dw-1 == -1 falls off the left edge
        not_right = w_idx != W - 1       # dw-1 == +1 falls off the right edge

        taps = []
        for dh in range(3):
            for dw in range(3):
                s = (dh - 1) * W + (dw - 1)
                t = ye[:, PAD + s: PAD + s + HW]                   # (C0p, HW)
                if dw == 0:
                    t = jnp.where(not_left, t, 0.0)
                elif dw == 2:
                    t = jnp.where(not_right, t, 0.0)
                taps.append(t)
        y9 = jnp.concatenate(taps, axis=0)                         # (9*C0p, HW)

        # --- CBLR #2: 3x3 conv as ONE matmul (K = 9*C0p) + bias + LeakyReLU ---
        acc = jnp.dot(w2_ref[...], y9, preferred_element_type=jnp.float32)
        out = _leaky(acc + b2_ref[...])                            # (C1, HW)

        # --- residual add (planes[1] == inplanes) ---
        o_ref[0] = (out + x).astype(o_ref.dtype)

    out = pl.pallas_call(
        kernel,
        out_shape=jax.ShapeDtypeStruct((N, C1, HW), x_nchw.dtype),
        grid_spec=pltpu.PrefetchScalarGridSpec(
            num_scalar_prefetch=0,
            grid=(N,),
            in_specs=[
                pl.BlockSpec((1, Cin, HW), lambda n: (n, 0, 0)),   # lane-dense
                pl.BlockSpec((C0p, Cin), lambda n: (0, 0)),
                pl.BlockSpec((C0p, 1), lambda n: (0, 0)),
                pl.BlockSpec((C1, 9 * C0p), lambda n: (0, 0)),
                pl.BlockSpec((C1, 1), lambda n: (0, 0)),
            ],
            out_specs=pl.BlockSpec((1, C1, HW), lambda n: (n, 0, 0)),
        ),
        compiler_params=pltpu.CompilerParams(
            dimension_semantics=("parallel",)),
    )(x_flat, w1f, b1c, w2f, b2c)

    return out.reshape(N, C1, H, W)


def init_params(key, inplanes, planes):
    """Deterministic synthetic parameters mirroring the PyTorch module shapes."""
    p0, p1 = planes
    eps = 1e-5
    ks = jax.random.split(key, 10)

    # CBLR #1: Conv2d(inplanes, p0, k=1, pad=0, bias=False) + BN(p0)
    w1 = 0.1 * jax.random.normal(ks[0], (p0, inplanes), jnp.float32)   # 1x1 kernel
    g1 = 1.0 + 0.1 * jax.random.normal(ks[1], (p0,), jnp.float32)
    be1 = 0.1 * jax.random.normal(ks[2], (p0,), jnp.float32)
    m1 = 0.1 * jax.random.normal(ks[3], (p0,), jnp.float32)
    v1 = jax.random.uniform(ks[4], (p0,), jnp.float32, minval=0.5, maxval=1.5)
    s1 = g1 / jnp.sqrt(v1 + eps)
    b1 = be1 - m1 * s1

    # CBLR #2: Conv2d(p0, p1, k=3, pad=1, bias=False) + BN(p1)
    w2 = 0.1 * jax.random.normal(ks[5], (p1, p0, 3, 3), jnp.float32)   # OIHW
    g2 = 1.0 + 0.1 * jax.random.normal(ks[6], (p1,), jnp.float32)
    be2 = 0.1 * jax.random.normal(ks[7], (p1,), jnp.float32)
    m2 = 0.1 * jax.random.normal(ks[8], (p1,), jnp.float32)
    v2 = jax.random.uniform(ks[9], (p1,), jnp.float32, minval=0.5, maxval=1.5)
    s2 = g2 / jnp.sqrt(v2 + eps)
    b2 = be2 - m2 * s2

    return (w1, s1, b1, w2, s2, b2)


def ref_forward(x_nchw, params):
    """Plain-JAX reference (XLA convs, unfolded BN math) for correctness checking."""
    w1, s1, b1, w2, s2, b2 = params
    x = jnp.transpose(x_nchw, (0, 2, 3, 1))                            # NHWC
    y = jnp.einsum('nhwc,dc->nhwd', x, w1)
    y = _leaky(y * s1 + b1)
    w2_hwio = jnp.transpose(w2, (2, 3, 1, 0))                          # (3,3,C0,C1)
    z = lax.conv_general_dilated(y, w2_hwio, (1, 1), ((1, 1), (1, 1)),
                                 dimension_numbers=('NHWC', 'HWIO', 'NHWC'))
    z = _leaky(z * s2 + b2)
    return jnp.transpose(z + x, (0, 3, 1, 2))


if __name__ == "__main__":
    key = jax.random.PRNGKey(0)
    k_x, k_p = jax.random.split(key)

    N, inplanes, H, W = 2, 8, 16, 16
    planes = (4, 8)  # planes[1] == inplanes so the residual add is valid

    x = jax.random.normal(k_x, (N, inplanes, H, W), jnp.float32)
    params = init_params(k_p, inplanes, planes)

    out = jax.block_until_ready(basic_block_forward(x, params))
    ref = jax.block_until_ready(ref_forward(x, params))

    assert out.shape == (N, inplanes, H, W)
    err = jnp.max(jnp.abs(out - ref))
    assert jnp.allclose(out, ref, atol=1e-3, rtol=1e-3), f"max abs err = {err}"

    print("KERNEL_OK")
</pallas_src>

<mosaic_0001>
module attributes {stable_mosaic.version = 11 : i64} {
  func.func @kernel(%arg0: i32, %arg1: memref<1x8x256xf32, #tpu.memory_space<vmem>>, %arg2: memref<8x8xf32, #tpu.memory_space<vmem>>, %arg3: memref<8x1xf32, #tpu.memory_space<vmem>>, %arg4: memref<8x72xf32, #tpu.memory_space<vmem>>, %arg5: memref<8x1xf32, #tpu.memory_space<vmem>>, %arg6: memref<1x8x256xf32, #tpu.memory_space<vmem>>) attributes {dimension_semantics = [#tpu.dimension_semantics<parallel>], iteration_bounds = array<i64: 2>, scalar_prefetch = 0 : i64, scratch_operands = 0 : i64, tpu.core_type = #tpu.core_type<tc>, window_params = [{transform_indices = @transform_0, window_bounds = array<i64: 1, 8, 256>}, {pipeline_mode = #tpu.pipeline_mode<synchronous>, transform_indices = @transform_1, window_bounds = array<i64: 8, 8>}, {pipeline_mode = #tpu.pipeline_mode<synchronous>, transform_indices = @transform_2, window_bounds = array<i64: 8, 1>}, {pipeline_mode = #tpu.pipeline_mode<synchronous>, transform_indices = @transform_3, window_bounds = array<i64: 8, 72>}, {pipeline_mode = #tpu.pipeline_mode<synchronous>, transform_indices = @transform_4, window_bounds = array<i64: 8, 1>}, {transform_indices = @transform_5, window_bounds = array<i64: 1, 8, 256>}]} {
    %c0 = arith.constant 0 : index
    %c0_0 = arith.constant 0 : index
    %c0_1 = arith.constant 0 : index
    %0 = vector.load %arg1[%c0, %c0_0, %c0_1] : memref<1x8x256xf32, #tpu.memory_space<vmem>>, vector<1x8x256xf32>
    %1 = vector.shape_cast %0 : vector<1x8x256xf32> to vector<8x256xf32>
    %c0_2 = arith.constant 0 : index
    %c0_3 = arith.constant 0 : index
    %2 = vector.load %arg2[%c0_2, %c0_3] : memref<8x8xf32, #tpu.memory_space<vmem>>, vector<8x8xf32>
    %cst = arith.constant dense<0.000000e+00> : vector<8x256xf32>
    %3 = tpu.matmul %2, %1, %cst {dimension_numbers = #tpu.dot_dimension_numbers<[1], [0], [0], [1], [0, 0, 1, 1], [], []>} : vector<8x8xf32>, vector<8x256xf32>, vector<8x256xf32> -> vector<8x256xf32>
    %c0_4 = arith.constant 0 : index
    %c0_5 = arith.constant 0 : index
    %4 = vector.load %arg3[%c0_4, %c0_5] : memref<8x1xf32, #tpu.memory_space<vmem>>, vector<8x1xf32>
    %5 = vector.broadcast %4 : vector<8x1xf32> to vector<8x256xf32>
    %6 = arith.addf %3, %5 : vector<8x256xf32>
    %cst_6 = arith.constant 0.000000e+00 : f32
    %7 = vector.broadcast %cst_6 : f32 to vector<8x256xf32>
    %8 = arith.cmpf ogt, %6, %7 : vector<8x256xf32>
    %cst_7 = arith.constant 1.000000e-01 : f32
    %9 = vector.broadcast %cst_7 : f32 to vector<8x256xf32>
    %10 = arith.mulf %9, %6 : vector<8x256xf32>
    %11 = arith.select %8, %6, %10 : vector<8x256xi1>, vector<8x256xf32>
    %cst_8 = arith.constant 0.000000e+00 : f32
    %12 = vector.broadcast %cst_8 : f32 to vector<8x128xf32>
    %13 = tpu.concatenate %12, %11, %12 in 1 : vector<8x128xf32>, vector<8x256xf32>, vector<8x128xf32> -> vector<8x512xf32>
    %14 = tpu.iota {dimensions = array<i32: 1>} : vector<1x256xi32>
    %c16_i32 = arith.constant 16 : i32
    %c0_i32 = arith.constant 0 : i32
    %15 = arith.cmpi eq, %c16_i32, %c0_i32 : i32
    %c1_i32 = arith.constant 1 : i32
    %16 = arith.select %15, %c1_i32, %c16_i32 : i32
    %17 = vector.broadcast %16 : i32 to vector<1x256xi32>
    %18 = arith.remsi %14, %17 : vector<1x256xi32>
    %c0_i32_9 = arith.constant 0 : i32
    %19 = vector.broadcast %c0_i32_9 : i32 to vector<1x256xi32>
    %20 = arith.cmpi ne, %18, %19 : vector<1x256xi32>
    %c0_i32_10 = arith.constant 0 : i32
    %21 = vector.broadcast %c0_i32_10 : i32 to vector<1x256xi32>
    %22 = arith.cmpi slt, %18, %21 : vector<1x256xi32>
    %c0_i32_11 = arith.constant 0 : i32
    %23 = arith.cmpi slt, %16, %c0_i32_11 : i32
    %24 = vector.broadcast %23 : i1 to vector<1x256xi1>
    %25 = vector.broadcast %24 : vector<1x256xi1> to vector<1x256xi1>
    %26 = arith.xori %22, %25 : vector<1x256xi1>
    %27 = arith.andi %26, %20 : vector<1x256xi1>
    %28 = vector.broadcast %16 : i32 to vector<1x256xi32>
    %29 = arith.addi %18, %28 : vector<1x256xi32>
    %30 = arith.select %27, %29, %18 : vector<1x256xi1>, vector<1x256xi32>
    %c0_i32_12 = arith.constant 0 : i32
    %31 = vector.broadcast %c0_i32_12 : i32 to vector<1x256xi32>
    %32 = arith.cmpi ne, %30, %31 : vector<1x256xi32>
    %c15_i32 = arith.constant 15 : i32
    %33 = vector.broadcast %c15_i32 : i32 to vector<1x256xi32>
    %34 = arith.cmpi ne, %30, %33 : vector<1x256xi32>
    %35 = vector.extract_strided_slice %13 {offsets = [0, 111], sizes = [8, 256], strides = [1, 1]} : vector<8x512xf32> to vector<8x256xf32>
    %cst_13 = arith.constant 0.000000e+00 : f32
    %36 = vector.shape_cast %32 : vector<1x256xi1> to vector<1x256xi1>
    %37 = vector.broadcast %36 : vector<1x256xi1> to vector<8x256xi1>
    %38 = vector.broadcast %cst_13 : f32 to vector<8x256xf32>
    %39 = arith.select %37, %35, %38 : vector<8x256xi1>, vector<8x256xf32>
    %40 = vector.extract_strided_slice %13 {offsets = [0, 112], sizes = [8, 256], strides = [1, 1]} : vector<8x512xf32> to vector<8x256xf32>
    %41 = vector.extract_strided_slice %13 {offsets = [0, 113], sizes = [8, 256], strides = [1, 1]} : vector<8x512xf32> to vector<8x256xf32>
    %cst_14 = arith.constant 0.000000e+00 : f32
    %42 = vector.shape_cast %34 : vector<1x256xi1> to vector<1x256xi1>
    %43 = vector.broadcast %42 : vector<1x256xi1> to vector<8x256xi1>
    %44 = vector.broadcast %cst_14 : f32 to vector<8x256xf32>
    %45 = arith.select %43, %41, %44 : vector<8x256xi1>, vector<8x256xf32>
    %46 = vector.extract_strided_slice %13 {offsets = [0, 127], sizes = [8, 256], strides = [1, 1]} : vector<8x512xf32> to vector<8x256xf32>
    %cst_15 = arith.constant 0.000000e+00 : f32
    %47 = vector.shape_cast %32 : vector<1x256xi1> to vector<1x256xi1>
    %48 = vector.broadcast %47 : vector<1x256xi1> to vector<8x256xi1>
    %49 = vector.broadcast %cst_15 : f32 to vector<8x256xf32>
    %50 = arith.select %48, %46, %49 : vector<8x256xi1>, vector<8x256xf32>
    %51 = vector.extract_strided_slice %13 {offsets = [0, 128], sizes = [8, 256], strides = [1, 1]} : vector<8x512xf32> to vector<8x256xf32>
    %52 = vector.extract_strided_slice %13 {offsets = [0, 129], sizes = [8, 256], strides = [1, 1]} : vector<8x512xf32> to vector<8x256xf32>
    %cst_16 = arith.constant 0.000000e+00 : f32
    %53 = vector.shape_cast %34 : vector<1x256xi1> to vector<1x256xi1>
    %54 = vector.broadcast %53 : vector<1x256xi1> to vector<8x256xi1>
    %55 = vector.broadcast %cst_16 : f32 to vector<8x256xf32>
    %56 = arith.select %54, %52, %55 : vector<8x256xi1>, vector<8x256xf32>
    %57 = vector.extract_strided_slice %13 {offsets = [0, 143], sizes = [8, 256], strides = [1, 1]} : vector<8x512xf32> to vector<8x256xf32>
    %cst_17 = arith.constant 0.000000e+00 : f32
    %58 = vector.shape_cast %32 : vector<1x256xi1> to vector<1x256xi1>
    %59 = vector.broadcast %58 : vector<1x256xi1> to vector<8x256xi1>
    %60 = vector.broadcast %cst_17 : f32 to vector<8x256xf32>
    %61 = arith.select %59, %57, %60 : vector<8x256xi1>, vector<8x256xf32>
    %62 = vector.extract_strided_slice %13 {offsets = [0, 144], sizes = [8, 256], strides = [1, 1]} : vector<8x512xf32> to vector<8x256xf32>
    %63 = vector.extract_strided_slice %13 {offsets = [0, 145], sizes = [8, 256], strides = [1, 1]} : vector<8x512xf32> to vector<8x256xf32>
    %cst_18 = arith.constant 0.000000e+00 : f32
    %64 = vector.shape_cast %34 : vector<1x256xi1> to vector<1x256xi1>
    %65 = vector.broadcast %64 : vector<1x256xi1> to vector<8x256xi1>
    %66 = vector.broadcast %cst_18 : f32 to vector<8x256xf32>
    %67 = arith.select %65, %63, %66 : vector<8x256xi1>, vector<8x256xf32>
    %68 = tpu.concatenate %39, %40, %45, %50, %51, %56, %61, %62, %67 in 0 : vector<8x256xf32>, vector<8x256xf32>, vector<8x256xf32>, vector<8x256xf32>, vector<8x256xf32>, vector<8x256xf32>, vector<8x256xf32>, vector<8x256xf32>, vector<8x256xf32> -> vector<72x256xf32>
    %c0_19 = arith.constant 0 : index
    %c0_20 = arith.constant 0 : index
    %69 = vector.load %arg4[%c0_19, %c0_20] : memref<8x72xf32, #tpu.memory_space<vmem>>, vector<8x72xf32>
    %cst_21 = arith.constant dense<0.000000e+00> : vector<8x256xf32>
    %70 = tpu.matmul %69, %68, %cst_21 {dimension_numbers = #tpu.dot_dimension_numbers<[1], [0], [0], [1], [0, 0, 1, 1], [], []>} : vector<8x72xf32>, vector<72x256xf32>, vector<8x256xf32> -> vector<8x256xf32>
    %c0_22 = arith.constant 0 : index
    %c0_23 = arith.constant 0 : index
    %71 = vector.load %arg5[%c0_22, %c0_23] : memref<8x1xf32, #tpu.memory_space<vmem>>, vector<8x1xf32>
    %72 = vector.broadcast %71 : vector<8x1xf32> to vector<8x256xf32>
    %73 = arith.addf %70, %72 : vector<8x256xf32>
    %cst_24 = arith.constant 0.000000e+00 : f32
    %74 = vector.broadcast %cst_24 : f32 to vector<8x256xf32>
    %75 = arith.cmpf ogt, %73, %74 : vector<8x256xf32>
    %cst_25 = arith.constant 1.000000e-01 : f32
    %76 = vector.broadcast %cst_25 : f32 to vector<8x256xf32>
    %77 = arith.mulf %76, %73 : vector<8x256xf32>
    %78 = arith.select %75, %73, %77 : vector<8x256xi1>, vector<8x256xf32>
    %79 = arith.addf %78, %1 : vector<8x256xf32>
    %c0_26 = arith.constant 0 : index
    %c0_27 = arith.constant 0 : index
    %c0_28 = arith.constant 0 : index
    %80 = vector.load %arg6[%c0_26, %c0_27, %c0_28] : memref<1x8x256xf32, #tpu.memory_space<vmem>>, vector<1x8x256xf32>
    %81 = vector.shape_cast %80 : vector<1x8x256xf32> to vector<8x256xf32>
    %82 = vector.shape_cast %79 : vector<8x256xf32> to vector<1x8x256xf32>
    tpu.vector_store %arg6[%c0_26, %c0_27, %c0_28], %82 {strides = array<i32>} : memref<1x8x256xf32, #tpu.memory_space<vmem>>, vector<1x8x256xf32>,
    return
  }
  func.func @transform_0(%arg0: i32) -> (i32, i32, i32) {
    %c0_i32 = arith.constant 0 : i32
    %c0_i32_0 = arith.constant 0 : i32
    %c0_i32_1 = arith.constant 0 : i32
    return %arg0, %c0_i32, %c0_i32_0 : i32, i32, i32
  }
  func.func @transform_1(%arg0: i32) -> (i32, i32) {
    %c0_i32 = arith.constant 0 : i32
    %c0_i32_0 = arith.constant 0 : i32
    %c0_i32_1 = arith.constant 0 : i32
    return %c0_i32, %c0_i32_0 : i32, i32
  }
  func.func @transform_2(%arg0: i32) -> (i32, i32) {
    %c0_i32 = arith.constant 0 : i32
    %c0_i32_0 = arith.constant 0 : i32
    %c0_i32_1 = arith.constant 0 : i32
    return %c0_i32, %c0_i32_0 : i32, i32
  }
  func.func @transform_3(%arg0: i32) -> (i32, i32) {
    %c0_i32 = arith.constant 0 : i32
    %c0_i32_0 = arith.constant 0 : i32
    %c0_i32_1 = arith.constant 0 : i32
    return %c0_i32, %c0_i32_0 : i32, i32
  }
  func.func @transform_4(%arg0: i32) -> (i32, i32) {
    %c0_i32 = arith.constant 0 : i32
    %c0_i32_0 = arith.constant 0 : i32
    %c0_i32_1 = arith.constant 0 : i32
    return %c0_i32, %c0_i32_0 : i32, i32
  }
  func.func @transform_5(%arg0: i32) -> (i32, i32, i32) {
    %c0_i32 = arith.constant 0 : i32
    %c0_i32_0 = arith.constant 0 : i32
    %c0_i32_1 = arith.constant 0 : i32
    return %arg0, %c0_i32, %c0_i32_0 : i32, i32, i32
  }
}

</mosaic_0001>

<llo_original>
// kernel: tpu_custom_call.1
$region0: #{tpu_custom_call.1}
  #allocation0 [shape = 'u32[]', space=smem, size = 0x4, offset = 0x4, fixed_abs, tag = 'smem constant byte address 0x4 - core index']
  #allocation1 [shape = 'u32[144,128]{1,0:T(1,128)}', space=vmem, size = 0x12000, scoped, tag = 'internal scratch']
  %s0 = inlined_call_operand.hbm [shape: f32[2,8,256], index: 0, kind: input, shape index: {}]
  %s1 = inlined_call_operand.vmem [shape: f32[8,8], index: 1, kind: input, shape index: {}]
  %s2 = inlined_call_operand.vmem [shape: f32[8,1], index: 2, kind: input, shape index: {}]
  %s3 = inlined_call_operand.vmem [shape: f32[8,72], index: 3, kind: input, shape index: {}]
  %s4 = inlined_call_operand.vmem [shape: f32[8,1], index: 4, kind: input, shape index: {}]
  %s5 = inlined_call_operand.hbm [shape: f32[2,8,256], index: 5, kind: output, shape index: {}]
  %s6 = sld [smem:[#allocation0]]
  $region57: #{tpu_custom_call.1} parent=0
    _
  %s8 = ssub.s32 1, %s6
  %s9 = scalar_select 0, %s8, %s6
  $region1: #{tpu_custom_call.1} parent=0
    #allocation2 [shape = 'u8[16384]{0}', space=vmem, size = 0x4000, scoped, tag = 'input window, operand 0']
    #allocation3 [shape = 's32[2]{0}', space=sflag, size = 0x8, scoped, tag = 'scoped memory for tpu_custom_call.1']
    #allocation4 [shape = 's32[2]{0}', space=sflag, size = 0x8, scoped, tag = 'scoped memory for tpu_custom_call.1']
    #allocation5 [shape = 'u8[16384]{0}', space=vmem, size = 0x4000, scoped, tag = 'output window, operand 0']
    %10 = vsyncpa [#allocation3], 0
    %s11 = scalar_lea.sflag [#allocation3], 1
    %12 = vsyncpa %s11, 0
    %13 = vsyncpa [#allocation4], 0
    %s14 = scalar_lea.sflag [#allocation4], 1
    %15 = vsyncpa %s14, 0
    loop: start=0, step=1, limit=4
    $region2: #{tpu_custom_call.1} parent=1 // loop_pre_header
      _
    $region3: #{tpu_custom_call.1} parent=1 // loop_header
      %s17 = sphi 0, %s21
      %p18 = scmp.ge.s32.totalorder %s17, 4
      %s27 = sphi 0, %s29
      %s30 = sphi 0, %s27
      %s31 = sphi 0, %s30
      %s47 = sphi 0, %s31
      %s51 = sphi 0, %s51
      %s53 = sphi 0, %s51
      %s54 = sphi 0, %s53
      %s68 = sphi 0, %s54
      %s72 = sphi 0, %s72
      %s74 = sphi 0, %s72
      %s75 = sphi 0, %s74
      %s89 = sphi 0, %s75
      %s93 = sphi 0, %s93
      %s95 = sphi 0, %s93
      %s96 = sphi 0, %s95
      %s110 = sphi 0, %s96
      %s114 = sphi 0, %s114
      %s116 = sphi 0, %s114
      %s117 = sphi 0, %s116
      %s131 = sphi 0, %s117
      %s137 = sphi 0, %s139
      %s140 = sphi 0, %s137
      %s141 = sphi 0, %s140
      %s157 = sphi 0, %s141
    $region4: #{tpu_custom_call.1} parent=1 // loop_header_branch
      %20 = sbr.rel (%p18) target = $region8
    $region5: #{tpu_custom_call.1} parent=1 // loop_body
      %s22 = ssub.s32 %s17, 1
      %s23 = ssub.s32 %s17, 2
      %s24 = sadd.s32 %s17, 1
      %s25 = ssub.s32 %s17, %s24
      %p26 = scmp.eq.s32.totalorder %s25, 0
      %s28 = sadd.s32 %s27, 1
      %s29 = scalar_select %p26, %s27, %s28
      %p32 = pneg %p26
      %p33 = scmp.eq.s32.totalorder %s17, 1
      %p34 = por %p32, %p33
      %p35 = scmp.ne.s32.totalorder %s27, %s30
      %p36 = scmp.eq.s32.totalorder %s17, 0
      %p37 = por %p35, %p36
      %p38 = scmp.ne.s32.totalorder %s27, %s30
      %p39 = scmp.eq.s32.totalorder %s22, 1
      %p40 = por %p38, %p39
      %p41 = scmp.ne.s32.totalorder %s30, %s31
      %p42 = scmp.eq.s32.totalorder %s22, 0
      %p43 = por %p41, %p42
      %p44 = scmp.ne.s32.totalorder %s30, %s31
      %p45 = scmp.eq.s32.totalorder %s23, 1
      %p46 = por %p44, %p45
      %p48 = scmp.ne.s32.totalorder %s31, %s47
      %p49 = scmp.eq.s32.totalorder %s23, 0
      %p50 = por %p48, %p49
      %s52 = sadd.s32 %s51, 1
      %p55 = scmp.eq.s32.totalorder %s17, 1
      %p56 = scmp.ne.s32.totalorder %s51, %s53
      %p57 = scmp.eq.s32.totalorder %s17, 0
      %p58 = por %p56, %p57
      %p59 = scmp.ne.s32.totalorder %s51, %s53
      %p60 = scmp.eq.s32.totalorder %s22, 1
      %p61 = por %p59, %p60
      %p62 = scmp.ne.s32.totalorder %s53, %s54
      %p63 = scmp.eq.s32.totalorder %s22, 0
      %p64 = por %p62, %p63
      %p65 = scmp.ne.s32.totalorder %s53, %s54
      %p66 = scmp.eq.s32.totalorder %s23, 1
      %p67 = por %p65, %p66
      %p69 = scmp.ne.s32.totalorder %s54, %s68
      %p70 = scmp.eq.s32.totalorder %s23, 0
      %p71 = por %p69, %p70
      %s73 = sadd.s32 %s72, 1
      %p76 = scmp.eq.s32.totalorder %s17, 1
      %p77 = scmp.ne.s32.totalorder %s72, %s74
      %p78 = scmp.eq.s32.totalorder %s17, 0
      %p79 = por %p77, %p78
      %p80 = scmp.ne.s32.totalorder %s72, %s74
      %p81 = scmp.eq.s32.totalorder %s22, 1
      %p82 = por %p80, %p81
      %p83 = scmp.ne.s32.totalorder %s74, %s75
      %p84 = scmp.eq.s32.totalorder %s22, 0
      %p85 = por %p83, %p84
      %p86 = scmp.ne.s32.totalorder %s74, %s75
      %p87 = scmp.eq.s32.totalorder %s23, 1
      %p88 = por %p86, %p87
      %p90 = scmp.ne.s32.totalorder %s75, %s89
      %p91 = scmp.eq.s32.totalorder %s23, 0
      %p92 = por %p90, %p91
      %s94 = sadd.s32 %s93, 1
      %p97 = scmp.eq.s32.totalorder %s17, 1
      %p98 = scmp.ne.s32.totalorder %s93, %s95
      %p99 = scmp.eq.s32.totalorder %s17, 0
      %p100 = por %p98, %p99
      %p101 = scmp.ne.s32.totalorder %s93, %s95
      %p102 = scmp.eq.s32.totalorder %s22, 1
      %p103 = por %p101, %p102
      %p104 = scmp.ne.s32.totalorder %s95, %s96
      %p105 = scmp.eq.s32.totalorder %s22, 0
      %p106 = por %p104, %p105
      %p107 = scmp.ne.s32.totalorder %s95, %s96
      %p108 = scmp.eq.s32.totalorder %s23, 1
      %p109 = por %p107, %p108
      %p111 = scmp.ne.s32.totalorder %s96, %s110
      %p112 = scmp.eq.s32.totalorder %s23, 0
      %p113 = por %p111, %p112
      %s115 = sadd.s32 %s114, 1
      %p118 = scmp.eq.s32.totalorder %s17, 1
      %p119 = scmp.ne.s32.totalorder %s114, %s116
      %p120 = scmp.eq.s32.totalorder %s17, 0
      %p121 = por %p119, %p120
      %p122 = scmp.ne.s32.totalorder %s114, %s116
      %p123 = scmp.eq.s32.totalorder %s22, 1
      %p124 = por %p122, %p123
      %p125 = scmp.ne.s32.totalorder %s116, %s117
      %p126 = scmp.eq.s32.totalorder %s22, 0
      %p127 = por %p125, %p126
      %p128 = scmp.ne.s32.totalorder %s116, %s117
      %p129 = scmp.eq.s32.totalorder %s23, 1
      %p130 = por %p128, %p129
      %p132 = scmp.ne.s32.totalorder %s117, %s131
      %p133 = scmp.eq.s32.totalorder %s23, 0
      %p134 = por %p132, %p133
      %s135 = ssub.s32 %s17, %s24
      %p136 = scmp.eq.s32.totalorder %s135, 0
      %s138 = sadd.s32 %s137, 1
      %s139 = scalar_select %p136, %s137, %s138
      %p142 = pneg %p136
      %p143 = scmp.eq.s32.totalorder %s17, 1
      %p144 = por %p142, %p143
      %p145 = scmp.ne.s32.totalorder %s137, %s140
      %p146 = scmp.eq.s32.totalorder %s17, 0
      %p147 = por %p145, %p146
      %p148 = scmp.ne.s32.totalorder %s137, %s140
      %p149 = scmp.eq.s32.totalorder %s22, 1
      %p150 = por %p148, %p149
      %p151 = scmp.ne.s32.totalorder %s140, %s141
      %p152 = scmp.eq.s32.totalorder %s22, 0
      %p153 = por %p151, %p152
      %p154 = scmp.ne.s32.totalorder %s140, %s141
      %p155 = scmp.eq.s32.totalorder %s23, 1
      %p156 = por %p154, %p155
      %p158 = scmp.ne.s32.totalorder %s141, %s157
      %p159 = scmp.eq.s32.totalorder %s23, 0
      %p160 = por %p158, %p159
      %p161 = scmp.le.s32.totalorder 1, %s17
      %p162 = scmp.lt.s32.totalorder %s17, 3
      %p163 = pnand %p161, %p162
      %p164 = pneg %p163
      // Predicated region
      $region9: #{tpu_custom_call.1} parent=5 // pred_check
        _
      $region10: #{tpu_custom_call.1} parent=5 // pred_check_branch
        %166 = sbr.rel (%p163) target = $region12
      $region11: #{tpu_custom_call.1} parent=5 // pred_region
        %s167 = ssub.s32 %s17, 1
        // Predicated region
        $region13: #{tpu_custom_call.1} parent=11 // pred_check
          %p168 = pneg %p64
        $region14: #{tpu_custom_call.1} parent=11 // pred_check_branch
          %170 = sbr.rel (%p168) target = $region16
        $region15: #{tpu_custom_call.1} parent=11 // pred_region
          _
        $region16: #{tpu_custom_call.1} parent=11 // pred_fallthru
          _
        // Predicated region
        $region17: #{tpu_custom_call.1} parent=11 // pred_check
          %p171 = pneg %p85
        $region18: #{tpu_custom_call.1} parent=11 // pred_check_branch
          %173 = sbr.rel (%p171) target = $region20
        $region19: #{tpu_custom_call.1} parent=11 // pred_region
          _
        $region20: #{tpu_custom_call.1} parent=11 // pred_fallthru
          _
        // Predicated region
        $region21: #{tpu_custom_call.1} parent=11 // pred_check
          %p174 = pneg %p106
        $region22: #{tpu_custom_call.1} parent=11 // pred_check_branch
          %176 = sbr.rel (%p174) target = $region24
        $region23: #{tpu_custom_call.1} parent=11 // pred_region
          _
        $region24: #{tpu_custom_call.1} parent=11 // pred_fallthru
          _
        // Predicated region
        $region25: #{tpu_custom_call.1} parent=11 // pred_check
          %p177 = pneg %p127
        $region26: #{tpu_custom_call.1} parent=11 // pred_check_branch
          %179 = sbr.rel (%p177) target = $region28
        $region27: #{tpu_custom_call.1} parent=11 // pred_region
          _
        $region28: #{tpu_custom_call.1} parent=11 // pred_fallthru
          _
      $region12: #{tpu_custom_call.1} parent=5 // pred_fallthru
        _
      %p180 = scmp.lt.s32.totalorder %s17, 2
      // Predicated region
      $region29: #{tpu_custom_call.1} parent=5 // pred_check
        %p181 = pneg %p180
      $region30: #{tpu_custom_call.1} parent=5 // pred_check_branch
        %183 = sbr.rel (%p181) target = $region32
      $region31: #{tpu_custom_call.1} parent=5 // pred_region
        // Predicated region
        $region33: #{tpu_custom_call.1} parent=31 // pred_check
          %p184 = pneg %p37
        $region34: #{tpu_custom_call.1} parent=31 // pred_check_branch
          %186 = sbr.rel (%p184) target = $region36
        $region35: #{tpu_custom_call.1} parent=31 // pred_region
          %s187 = sand.u32 %s27, 1
          %s188 = scalar_lea.sflag [#allocation3], %s187
          %s189 = sand.u32 %s27, 1
          %s190 = smul.addr %s189, 16
          %s191 = scalar_lea.vmem [#allocation2], %s190
          %s193 = ssub.s32 256, 256
          %194 = vsyncadd %s188, %s193
          %s195 = smul.addr %s17, 2
          %s196 = smul.addr %s195, 128
          %s197 = scalar_lea.hbm %s0, %s196
          %s199 = sshll.u32 %s191, 4
          %s200 = int_to_ptr.vmem [resolvable:$true] %s199
          %202 = dma.hbm_to_vmem [thread:$0]  %s197, 256, %s200, %s188
        $region36: #{tpu_custom_call.1} parent=31 // pred_fallthru
          _
      $region32: #{tpu_custom_call.1} parent=5 // pred_fallthru
        _
      %p203 = scmp.le.s32.totalorder 1, %s17
      %p204 = scmp.lt.s32.totalorder %s17, 3
      %p205 = pnand %p203, %p204
      %p206 = pneg %p205
      // Predicated region
      $region37: #{tpu_custom_call.1} parent=5 // pred_check
        _
      $region38: #{tpu_custom_call.1} parent=5 // pred_check_branch
        %208 = sbr.rel (%p205) target = $region40
      $region39: #{tpu_custom_call.1} parent=5 // pred_region
        %s209 = ssub.s32 %s17, 1
        %s210 = sand.u32 %s30, 1
        %s211 = scalar_lea.sflag [#allocation3], %s210
        %s212 = sand.u32 %s30, 1
        %s213 = smul.addr %s212, 16
        %s214 = scalar_lea.vmem [#allocation2], %s213
        // Predicated region
        $region41: #{tpu_custom_call.1} parent=39 // pred_check
          %p215 = pneg %p43
        $region42: #{tpu_custom_call.1} parent=39 // pred_check_branch
          %217 = sbr.rel (%p215) target = $region44
        $region43: #{tpu_custom_call.1} parent=39 // pred_region
          %218 = dma.done %s211, 256
        $region44: #{tpu_custom_call.1} parent=39 // pred_fallthru
          _
        %s219 = sand.u32 %s30, 1
        %s220 = scalar_lea.sflag [#allocation3], %s219
        %s221 = sand.u32 %s30, 1
        %s222 = smul.addr %s221, 16
        %s223 = scalar_lea.vmem [#allocation2], %s222
        %p224 = pneg %p43
        %p225 = pneg %p40
        %p226 = pneg %p64
        %p227 = pneg %p61
        %p228 = pneg %p85
        %p229 = pneg %p82
        %p230 = pneg %p106
        %p231 = pneg %p103
        %p232 = pneg %p127
        %p233 = pneg %p124
        %p234 = pneg %p153
        %p235 = pneg %p150
        %s236 = sand.u32 %s140, 1
        %s237 = scalar_lea.sflag [#allocation4], %s236
        %s238 = sand.u32 %s140, 1
        %s239 = smul.addr %s238, 16
        %s240 = scalar_lea.vmem [#allocation5], %s239
        %v241 = vld [vmem:[%s214] sm:$0xff]
        %v242 = vld [vmem:[%s214 + $0x8] sm:$0xff]
        %v243 = vld [vmem:[%s1] sm:$0xff]
        %v244 = vld [vmem:[%s2] sm:$0xff]
        %246 = vset.pattern.permute.xlu0 0
        %247 = vperm.xlu0 %246, %v244
        %v248 = vpop.permute.xlu0 %247
        %vm250 = vcmask 64512
        %v252 = vsel %vm250, %v243, 0
        %254 = vmatprep.subr.mxu0 %v242
        %255 = vmatpush1.msra.mxu0 %v241
        %256 = vmatprep.subr.mxu0 0.0
        %257 = vmatpush1.msra.mxu0 0.0
        %258 = vmatprep.subr.mxu0 0.0
        %259 = vmatpush1.msra.mxu0 0.0
        %260 = vmatprep.subr.mxu0 0.0
        %261 = vmatpush1.msra.mxu0 0.0
        %262 = vmatprep.subr.mxu0 0.0
        %263 = vmatpush1.msra.mxu0 0.0
        %264 = vmatprep.subr.mxu0 0.0
        %265 = vmatpush1.msra.mxu0 0.0
        %266 = vmatprep.subr.mxu0 0.0
        %267 = vmatpush1.msra.mxu0 0.0
        %268 = vmatprep.subr.mxu0 0.0
        %269 = vmatpush1.msra.mxu0 0.0
        %270 = vmatprep.subr.mxu0 0.0
        %271 = vmatpush1.msra.mxu0 0.0
        %272 = vmatprep.subr.mxu0 0.0
        %273 = vmatpush1.msra.mxu0 0.0
        %274 = vmatprep.subr.mxu0 0.0
        %275 = vmatpush1.msra.mxu0 0.0
        %276 = vmatprep.subr.mxu0 0.0
        %277 = vmatpush1.msra.mxu0 0.0
        %278 = vmatprep.subr.mxu0 0.0
        %279 = vmatpush1.msra.mxu0 0.0
        %280 = vmatprep.subr.mxu0 0.0
        %281 = vmatpush1.msra.mxu0 0.0
        %282 = vmatprep.subr.mxu0 0.0
        %283 = vmatpush1.msra.mxu0 0.0
        %284 = vmatprep.subr.mxu0 0.0
        %285 = vmatpush1.msra.mxu0 0.0
        %286 = vmatprep.subr.mxu0 0.0
        %287 = vmatpush1.msra.mxu0 0.0
        %288 = vmatprep.subr.mxu0 0.0
        %289 = vmatpush1.msra.mxu0 0.0
        %290 = vmatprep.subr.mxu0 0.0
        %291 = vmatpush1.msra.mxu0 0.0
        %292 = vmatprep.subr.mxu0 0.0
        %293 = vmatpush1.msra.mxu0 0.0
        %294 = vmatprep.subr.mxu0 0.0
        %295 = vmatpush1.msra.mxu0 0.0
        %296 = vmatprep.subr.mxu0 0.0
        %297 = vmatpush1.msra.mxu0 0.0
        %298 = vmatprep.subr.mxu0 0.0
        %299 = vmatpush1.msra.mxu0 0.0
        %300 = vmatprep.subr.mxu0 0.0
        %301 = vmatpush1.msra.mxu0 0.0
        %302 = vmatprep.subr.mxu0 0.0
        %303 = vmatpush1.msra.mxu0 0.0
        %304 = vmatprep.subr.mxu0 0.0
        %305 = vmatpush1.msra.mxu0 0.0
        %306 = vmatprep.subr.mxu0 0.0
        %307 = vmatpush1.msra.mxu0 0.0
        %308 = vmatprep.subr.mxu0 0.0
        %309 = vmatpush1.msra.mxu0 0.0
        %310 = vmatprep.subr.mxu0 0.0
        %311 = vmatpush1.msra.mxu0 0.0
        %312 = vmatprep.subr.mxu0 0.0
        %313 = vmatpush1.msra.mxu0 0.0
        %314 = vmatprep.subr.mxu0 0.0
        %315 = vmatpush1.msra.mxu0 0.0
        %316 = vmatprep.subr.mxu0 0.0
        %317 = vmatpush1.msra.mxu0 0.0
        %318 = vmatprep.mubr.f32.mxu0 0.0
        %319 = vmatmul.mubr.f32.gmra.mrb[0].mxu0 %v252
        %v320 = vpop.f32.mrb[0].mxu0
        %v321 = vadd.f32 %v248, %v320
        %v322 = vpop.f32.mrb[0].mxu0
        %v323 = vadd.f32 %v248, %v322
        %324 = vdwg.mxu0
        %vm325 = vcmp.gt.f32.partialorder %v321, 0.0
        %vm326 = vcmp.gt.f32.partialorder %v323, 0.0
        %v327 = vmul.f32 %v321, 0.1
        %v328 = vmul.f32 %v323, 0.1
        %v329 = vsel %vm325, %v321, %v327
        %v330 = vsel %vm326, %v323, %v328
        %v331 = vlaneseq
        %v332 = vand.u32 %v331, 127
        %v333 = vadd.s32 %v332, 128
        %vm334 = vcmp.lt.s32.totalorder %v332, 0
        %v335 = vsub.s32 0, %v332
        %v336 = vsel %vm334, %v335, %v332
        %v337 = vshrl.u32 %v336, 4
        %v338 = vand.u32 %v336, 15
        %v339 = vsub.s32 0, %v338
        %v340 = vsel %vm334, %v339, %v338
        %vm341 = vcmp.lt.s32.totalorder %v333, 0
        %v342 = vsub.s32 0, %v333
        %v343 = vsel %vm341, %v342, %v333
        %v344 = vshrl.u32 %v343, 4
        %v345 = vand.u32 %v343, 15
        %v346 = vsub.s32 0, %v345
        %v347 = vsel %vm341, %v346, %v345
        %vm348 = vcmp.ne.s32.totalorder %v340, 0
        %vm349 = vcmp.ne.s32.totalorder %v347, 0
        %vm350 = vcmp.lt.s32.totalorder %v340, 0
        %vm351 = vcmp.lt.s32.totalorder %v347, 0
        %vm352 = vmand %vm350, %vm348
        %vm353 = vmand %vm351, %vm349
        %v354 = vadd.s32 %v340, 16
        %v355 = vadd.s32 %v347, 16
        %v356 = vsel %vm352, %v354, %v340
        %v357 = vsel %vm353, %v355, %v347
        %vm358 = vcmp.ne.s32.totalorder %v356, 0
        %vm359 = vcmp.ne.s32.totalorder %v357, 0
        %vm360 = vcmp.ne.s32.totalorder %v356, 15
        %vm361 = vcmp.ne.s32.totalorder %v357, 15
        %v362 = vsel %vm358, 1, 0
        %v363 = vsel %vm359, 1, 0
        %vm364 = vcmp.eq.s32.totalorder %v362, 1
        %vm365 = vcmp.eq.s32.totalorder %v363, 1
        %369 = vrot.lane.b32.xlu0 0.0, 17
        %v370 = vpop.permute.xlu0 %369
        %371 = vrot.lane.b32.xlu0 %v329, 17
        %v372 = vpop.permute.xlu0 %371
        %373 = vrot.lane.b32.xlu0 %v330, 17
        %v374 = vpop.permute.xlu0 %373
        %vm375 = vcmask 138240
        %v376 = vsel %vm375, %v370, %v372
        %v377 = vsel %vm375, %v372, %v374
        %v380 = vsel %vm364, %v376, 0.0
        %v381 = vsel %vm365, %v377, 0.0
        %v382 = vsel %vm360, 1, 0
        %v383 = vsel %vm361, 1, 0
        %vm384 = vcmp.eq.s32.totalorder %v382, 1
        %vm385 = vcmp.eq.s32.totalorder %v383, 1
        %386 = vrot.lane.b32.xlu0 0.0, 15
        %v387 = vpop.permute.xlu0 %386
        %388 = vrot.lane.b32.xlu0 %v329, 15
        %v389 = vpop.permute.xlu0 %388
        %390 = vrot.lane.b32.xlu0 %v330, 15
        %v391 = vpop.permute.xlu0 %390
        %vm392 = vcmask 121856
        %v393 = vsel %vm392, %v387, %v389
        %v394 = vsel %vm392, %v389, %v391
        %v397 = vsel %vm384, %v393, 0.0
        %v398 = vsel %vm385, %v394, 0.0
        %399 = vrot.lane.b32.xlu0 0.0, 1
        %v400 = vpop.permute.xlu0 %399
        %401 = vrot.lane.b32.xlu0 %v329, 1
        %v402 = vpop.permute.xlu0 %401
        %403 = vrot.lane.b32.xlu0 %v330, 1
        %v404 = vpop.permute.xlu0 %403
        %vm405 = vcmask 7168
        %v406 = vsel %vm405, %v400, %v402
        %v407 = vsel %vm405, %v402, %v404
        %v410 = vsel %vm364, %v406, 0.0
        %v411 = vsel %vm365, %v407, 0.0
        %412 = vrot.lane.b32.xlu0 %v329, 127
        %v413 = vpop.permute.xlu0 %412
        %414 = vrot.lane.b32.xlu0 %v330, 127
        %v415 = vpop.permute.xlu0 %414
        %416 = vrot.lane.b32.xlu0 0.0, 127
        %v417 = vpop.permute.xlu0 %416
        %vm418 = vcmask 1039360
        %v419 = vsel %vm418, %v413, %v415
        %v420 = vsel %vm418, %v415, %v417
        %v423 = vsel %vm384, %v419, 0.0
        %v424 = vsel %vm385, %v420, 0.0
        %425 = vrot.lane.b32.xlu0 %v329, 113
        %v426 = vpop.permute.xlu0 %425
        %427 = vrot.lane.b32.xlu0 %v330, 113
        %v428 = vpop.permute.xlu0 %427
        %429 = vrot.lane.b32.xlu0 0.0, 113
        %v430 = vpop.permute.xlu0 %429
        %vm431 = vcmask 924672
        %v432 = vsel %vm431, %v426, %v428
        %v433 = vsel %vm431, %v428, %v430
        %v436 = vsel %vm364, %v432, 0.0
        %v437 = vsel %vm365, %v433, 0.0
        %438 = vrot.lane.b32.xlu0 %v329, 111
        %v439 = vpop.permute.xlu0 %438
        %440 = vrot.lane.b32.xlu0 %v330, 111
        %v441 = vpop.permute.xlu0 %440
        %442 = vrot.lane.b32.xlu0 0.0, 111
        %v443 = vpop.permute.xlu0 %442
        %vm444 = vcmask 908288
        %v445 = vsel %vm444, %v439, %v441
        %v446 = vsel %vm444, %v441, %v443
        %v449 = vsel %vm384, %v445, 0.0
        %v450 = vsel %vm385, %v446, 0.0
        %451 = vrot.lane.b32.xlu0 0.0, 16
        %v452 = vpop.permute.xlu0 %451
        %453 = vrot.lane.b32.xlu0 %v329, 16
        %v454 = vpop.permute.xlu0 %453
        %455 = vrot.lane.b32.xlu0 %v330, 16
        %v456 = vpop.permute.xlu0 %455
        %vm457 = vcmask 130048
        %v458 = vsel %vm457, %v452, %v454
        %v459 = vsel %vm457, %v454, %v456
        %462 = vrot.lane.b32.xlu0 %v329, 112
        %v463 = vpop.permute.xlu0 %462
        %464 = vrot.lane.b32.xlu0 %v330, 112
        %v465 = vpop.permute.xlu0 %464
        %466 = vrot.lane.b32.xlu0 0.0, 112
        %v467 = vpop.permute.xlu0 %466
        %vm468 = vcmask 916480
        %v469 = vsel %vm468, %v463, %v465
        %v470 = vsel %vm468, %v465, %v467
        %v473 = vld [vmem:[%s3] sm:$0xff]
        %v474 = vld [vmem:[%s4] sm:$0xff]
        %476 = vset.pattern.permute.xlu0 0
        %477 = vperm.xlu0 %476, %v474
        %v478 = vpop.permute.xlu0 %477
        %vm480 = vcmask 588800
        %v482 = vsel %vm480, %v473, 0
        %484 = vmatprep.subr.mxu0 %v381
        %485 = vmatpush1.msra.mxu0 %v380
        %486 = vmatprep.subr.mxu0 %v459
        %487 = vmatpush1.msra.mxu0 %v458
        %488 = vmatprep.subr.mxu0 %v398
        %489 = vmatpush1.msra.mxu0 %v397
        %490 = vmatprep.subr.mxu0 %v411
        %491 = vmatpush1.msra.mxu0 %v410
        %492 = vmatprep.subr.mxu0 %v330
        %493 = vmatpush1.msra.mxu0 %v329
        %494 = vmatprep.subr.mxu0 %v424
        %495 = vmatpush1.msra.mxu0 %v423
        %496 = vmatprep.subr.mxu0 %v437
        %497 = vmatpush1.msra.mxu0 %v436
        %498 = vmatprep.subr.mxu0 %v470
        %499 = vmatpush1.msra.mxu0 %v469
        %500 = vmatprep.subr.mxu0 %v450
        %501 = vmatpush1.msra.mxu0 %v449
        %502 = vmatprep.subr.mxu0 0.0
        %503 = vmatpush1.msra.mxu0 0.0
        %504 = vmatprep.subr.mxu0 0.0
        %505 = vmatpush1.msra.mxu0 0.0
        %506 = vmatprep.subr.mxu0 0.0
        %507 = vmatpush1.msra.mxu0 0.0
        %508 = vmatprep.subr.mxu0 0.0
        %509 = vmatpush1.msra.mxu0 0.0
        %510 = vmatprep.subr.mxu0 0.0
        %511 = vmatpush1.msra.mxu0 0.0
        %512 = vmatprep.subr.mxu0 0.0
        %513 = vmatpush1.msra.mxu0 0.0
        %514 = vmatprep.subr.mxu0 0.0
        %515 = vmatpush1.msra.mxu0 0.0
        %516 = vmatprep.subr.mxu0 0.0
        %517 = vmatpush1.msra.mxu0 0.0
        %518 = vmatprep.subr.mxu0 0.0
        %519 = vmatpush1.msra.mxu0 0.0
        %520 = vmatprep.subr.mxu0 0.0
        %521 = vmatpush1.msra.mxu0 0.0
        %522 = vmatprep.subr.mxu0 0.0
        %523 = vmatpush1.msra.mxu0 0.0
        %524 = vmatprep.subr.mxu0 0.0
        %525 = vmatpush1.msra.mxu0 0.0
        %526 = vmatprep.subr.mxu0 0.0
        %527 = vmatpush1.msra.mxu0 0.0
        %528 = vmatprep.subr.mxu0 0.0
        %529 = vmatpush1.msra.mxu0 0.0
        %530 = vmatprep.subr.mxu0 0.0
        %531 = vmatpush1.msra.mxu0 0.0
        %532 = vmatprep.subr.mxu0 0.0
        %533 = vmatpush1.msra.mxu0 0.0
        %534 = vmatprep.subr.mxu0 0.0
        %535 = vmatpush1.msra.mxu0 0.0
        %536 = vmatprep.subr.mxu0 0.0
        %537 = vmatpush1.msra.mxu0 0.0
        %538 = vmatprep.subr.mxu0 0.0
        %539 = vmatpush1.msra.mxu0 0.0
        %540 = vmatprep.subr.mxu0 0.0
        %541 = vmatpush1.msra.mxu0 0.0
        %542 = vmatprep.subr.mxu0 0.0
        %543 = vmatpush1.msra.mxu0 0.0
        %544 = vmatprep.subr.mxu0 0.0
        %545 = vmatpush1.msra.mxu0 0.0
        %546 = vmatprep.subr.mxu0 0.0
        %547 = vmatpush1.msra.mxu0 0.0
        %548 = vmatprep.mubr.f32.mxu0 0.0
        %549 = vmatmul.mubr.f32.gmra.mrb[0].mxu0 %v482
        %v550 = vpop.f32.mrb[0].mxu0
        %v551 = vadd.f32 %v478, %v550
        %v552 = vpop.f32.mrb[0].mxu0
        %v553 = vadd.f32 %v478, %v552
        %554 = vdwg.mxu0
        %vm555 = vcmp.gt.f32.partialorder %v551, 0.0
        %vm556 = vcmp.gt.f32.partialorder %v553, 0.0
        %v557 = vmul.f32 %v551, 0.1
        %v558 = vmul.f32 %v553, 0.1
        %v559 = vsel %vm555, %v551, %v557
        %v560 = vsel %vm556, %v553, %v558
        %v561 = vadd.f32 %v559, %v241
        %v562 = vadd.f32 %v560, %v242
        %563 = vst [vmem:[%s240] sm:$0xff] %v561
        %564 = vst [vmem:[%s240 + $0x8] sm:$0xff] %v562
        %s565 = sand.u32 %s140, 1
        %s566 = scalar_lea.sflag [#allocation4], %s565
        %s567 = sand.u32 %s140, 1
        %s568 = smul.addr %s567, 16
        %s569 = scalar_lea.vmem [#allocation5], %s568
        // Predicated region
        $region45: #{tpu_custom_call.1} parent=39 // pred_check
          %p570 = pneg %p150
        $region46: #{tpu_custom_call.1} parent=39 // pred_check_branch
          %572 = sbr.rel (%p570) target = $region48
        $region47: #{tpu_custom_call.1} parent=39 // pred_region
          %s574 = ssub.s32 256, 256
          %575 = vsyncadd %s566, %s574
          %s576 = smul.addr %s22, 2
          %s577 = smul.addr %s576, 128
          %s578 = scalar_lea.hbm %s5, %s577
          %s580 = sshll.u32 %s569, 4
          %s581 = int_to_ptr.vmem [resolvable:$true] %s580
          %583 = dma.vmem_to_hbm [thread:$0]  %s581, 256, %s578, %s566
        $region48: #{tpu_custom_call.1} parent=39 // pred_fallthru
          _
      $region40: #{tpu_custom_call.1} parent=5 // pred_fallthru
        _
      %p584 = scmp.le.s32.totalorder 2, %s17
      // Predicated region
      $region49: #{tpu_custom_call.1} parent=5 // pred_check
        %p585 = pneg %p584
      $region50: #{tpu_custom_call.1} parent=5 // pred_check_branch
        %587 = sbr.rel (%p585) target = $region52
      $region51: #{tpu_custom_call.1} parent=5 // pred_region
        %s588 = ssub.s32 %s17, 2
        // Predicated region
        $region53: #{tpu_custom_call.1} parent=51 // pred_check
          %p589 = pneg %p156
        $region54: #{tpu_custom_call.1} parent=51 // pred_check_branch
          %591 = sbr.rel (%p589) target = $region56
        $region55: #{tpu_custom_call.1} parent=51 // pred_region
          %s592 = sand.u32 %s141, 1
          %s593 = scalar_lea.sflag [#allocation4], %s592
          %s594 = sand.u32 %s141, 1
          %s595 = smul.addr %s594, 16
          %s596 = scalar_lea.vmem [#allocation5], %s595
          %597 = dma.done %s593, 256
        $region56: #{tpu_custom_call.1} parent=51 // pred_fallthru
          _
      $region52: #{tpu_custom_call.1} parent=5 // pred_fallthru
        _
    $region6: #{tpu_custom_call.1} parent=1 // loop_footer
      %s21 = sadd.s32 1, %s17
    $region7: #{tpu_custom_call.1} parent=1 // loop_footer_branch
      %16 = sbr.rel target = $region3
    $region8: #{tpu_custom_call.1} parent=1 // loop_exit
      _
    %598 = vsyncpa [#allocation3], 1
    %s599 = scalar_lea.sflag [#allocation3], 1
    %600 = vsyncpa %s599, 1
    %601 = vsyncpa [#allocation4], 1
    %s602 = scalar_lea.sflag [#allocation4], 1
    %603 = vsyncpa %s602, 1

</llo_original>
